<compile_context>
chip_gen: v7x
topology: tpu7x:2x2x1
jax: 0.10.0
libtpu: 0.0.40
codegen_flags: <defaults>
</compile_context>

<pallas_src>
import functools
import math

import jax
import jax.numpy as jnp
from jax.experimental import pallas as pl
from jax.experimental.pallas import tpu as pltpu


def _round_up(x, m):
    return ((x + m - 1) // m) * m


def _gelu_tanh(x):
    c = math.sqrt(2.0 / math.pi)
    return 0.5 * x * (1.0 + jnp.tanh(c * (x + 0.044715 * x * x * x)))


# -----------------------------------------------------------------------------
# Fused kernel: polyphase gather -> VMEM im2col tile -> MXU matmul -> bias -> GELU
# -----------------------------------------------------------------------------
def _make_fused_conv_kernel(C, C_enc, K, f, Wo, Wp):
    def kernel(ph_ref, w_ref, b_ref, o_ref, rhs_ref):
        # ph_ref : (1, f, 4*C, Lf)  bf16  polyphase planes, flattened per frame
        # w_ref  : (C_enc, K)       bf16  conv weight, column order (tap, c)
        # b_ref  : (C_enc, 1)       f32
        # o_ref  : (1, C_enc, f*Wo) f32   lane-dense output tile (f*Wo % 128 == 0)
        # rhs_ref: (K, f*Wo)        bf16  scratch: im2col tile built in VMEM
        #
        # Tap (ki, kj) of the stride-2 3x3 conv reads polyphase plane
        # p = (ki%2)*2 + (kj%2) at a constant flat offset off = (ki//2)*Wp + kj//2
        # relative to the (overcomputed) output position grid, so the gather is a
        # static lane-offset slice — no HBM im2col materialization.
        for k in range(f):            # frames in this grid step (static unroll)
            for tap in range(9):      # 3x3 taps (static unroll)
                ki, kj = divmod(tap, 3)
                p = (ki % 2) * 2 + (kj % 2)
                off = (ki // 2) * Wp + (kj // 2)
                rhs_ref[pl.ds(tap * C, C), pl.ds(k * Wo, Wo)] = (
                    ph_ref[0, k, pl.ds(p * C, C), pl.ds(off, Wo)]
                )
        # Single MXU matmul over the fused tile (bf16 x bf16 -> f32 accumulator).
        acc = jnp.dot(w_ref[...], rhs_ref[...],
                      preferred_element_type=jnp.float32)     # (C_enc, f*Wo)
        acc = acc + b_ref[...]                                # bias in f32
        o_ref[0] = _gelu_tanh(acc).astype(o_ref.dtype)        # GELU in f32, dense store

    return kernel


# -----------------------------------------------------------------------------
# Forward pass
# -----------------------------------------------------------------------------
def hdnerv3_encoder_forward(x, conv_w, conv_b, fc_h, fc_w, *, max_tile_lanes=2048):
    """x: (B, C, D, H, W) NCDHW f32.  conv_w: (C_enc, C, 1, 3, 3), conv_b: (C_enc,)."""
    B, C, D, H, W = x.shape
    C_enc = conv_w.shape[0]

    OH = (H + 2 - 3) // 2 + 1
    OW = (W + 2 - 3) // 2 + 1
    assert (OH, OW) == (fc_h, fc_w), ((OH, OW), (fc_h, fc_w))

    Hp, Wp = OH + 1, OW + 1              # polyphase plane dims
    Wo = _round_up(Hp * Wp, 128)         # per-frame output width (lane-dense)
    Lf = Wo + Wp + 1                     # per-frame flattened plane width incl. halo
    K = 9 * C

    # frames per grid step: largest divisor of D keeping the output tile lane width
    # at or below max_tile_lanes (keeps VMEM small even on v7x's 64 MiB).
    f = 1
    for cand in range(1, D + 1):
        if D % cand == 0 and cand * Wo <= max_tile_lanes:
            f = cand

    # ---- JAX prep: ~1x pass over the input, NOT a 9x im2col expansion ----------
    frames = jnp.transpose(x, (0, 2, 1, 3, 4))                        # (B, D, C, H, W)
    pad_b = 2 * Hp - H - 1
    pad_r = 2 * Wp - W - 1
    xp = jnp.pad(frames, ((0, 0), (0, 0), (0, 0), (1, pad_b), (1, pad_r)))
    # polyphase (space-to-depth by 2): (B,D,C,Hp,2,Wp,2) -> (B,D,2,2,C,Hp,Wp)
    ph = xp.reshape(B, D, C, Hp, 2, Wp, 2)
    ph = jnp.transpose(ph, (0, 1, 4, 6, 2, 3, 5))
    ph = ph.reshape(B, D, 4 * C, Hp * Wp)
    ph = jnp.pad(ph, ((0, 0), (0, 0), (0, 0), (0, Lf - Hp * Wp)))
    ph = ph.astype(jnp.bfloat16)                                      # (B, D, 4C, Lf)

    # weight (C_enc, C, 1, 3, 3) -> (C_enc, 9*C), column order (tap, c)
    w2 = jnp.transpose(conv_w[:, :, 0, :, :], (0, 2, 3, 1)).reshape(C_enc, K)
    w2 = w2.astype(jnp.bfloat16)
    b2 = conv_b.reshape(C_enc, 1).astype(jnp.float32)

    n_pos = D * Wo
    cost = pl.CostEstimate(
        flops=2 * B * n_pos * C_enc * K,
        transcendentals=B * n_pos * C_enc,
        bytes_accessed=int(ph.size * 2 + w2.size * 2 + b2.size * 4
                           + B * C_enc * n_pos * 4),
    )

    kernel = _make_fused_conv_kernel(C, C_enc, K, f, Wo, Wp)

    out3 = pl.pallas_call(
        kernel,
        out_shape=jax.ShapeDtypeStruct((B, C_enc, n_pos), jnp.float32),
        grid_spec=pltpu.PrefetchScalarGridSpec(
            num_scalar_prefetch=0,
            grid=(B, D // f),
            in_specs=[
                pl.BlockSpec((1, f, 4 * C, Lf), lambda b, j: (b, j, 0, 0)),
                pl.BlockSpec((C_enc, K), lambda b, j: (0, 0)),   # constant -> fetched once
                pl.BlockSpec((C_enc, 1), lambda b, j: (0, 0)),   # constant -> fetched once
            ],
            out_specs=pl.BlockSpec((1, C_enc, f * Wo), lambda b, j: (b, 0, j)),
            scratch_shapes=[pltpu.VMEM((K, f * Wo), jnp.bfloat16)],
        ),
        compiler_params=pltpu.CompilerParams(
            dimension_semantics=("parallel", "parallel"),   # B leading -> v7x megacore
        ),
        cost_estimate=cost,
    )(ph, w2, b2)                                            # (B, C_enc, D*Wo)

    # Drop the overcompute (garbage rows/cols of the Hp x Wp per-frame grid).
    y = out3.reshape(B, C_enc, D, Wo)[:, :, :, :Hp * Wp]
    y = y.reshape(B, C_enc, D, Hp, Wp)[:, :, :, :OH, :OW]    # == Conv3d out (B,Ce,D,fh,fw)

    # Wrapper semantics: output.view(B, -1, fc_h, fc_w, D).permute(0, 1, 4, 2, 3)
    viewed = y.reshape(B, -1, fc_h, fc_w, D)                 # row-major == torch .view
    return jnp.transpose(viewed, (0, 1, 4, 2, 3))            # single layout pass


# -----------------------------------------------------------------------------
# Pure-JAX reference (same operand precision: bf16 inputs, f32 math)
# -----------------------------------------------------------------------------
def _reference_forward(x, conv_w, conv_b, fc_h, fc_w):
    B, C, D, H, W = x.shape
    C_enc = conv_w.shape[0]
    OH, OW = fc_h, fc_w
    xb = x.astype(jnp.bfloat16).astype(jnp.float32)
    wb = conv_w.astype(jnp.bfloat16).astype(jnp.float32)
    frames = jnp.transpose(xb, (0, 2, 1, 3, 4))                       # (B, D, C, H, W)
    xp = jnp.pad(frames, ((0, 0), (0, 0), (0, 0), (1, 1), (1, 1)))
    y = jnp.zeros((B, D, C_enc, OH, OW), jnp.float32)
    for ki in range(3):
        for kj in range(3):
            tap = xp[:, :, :, ki:ki + 2 * OH:2, kj:kj + 2 * OW:2]     # (B,D,C,OH,OW)
            y = y + jnp.einsum("bdcxy,oc->bdoxy", tap, wb[:, :, 0, ki, kj],
                               precision=jax.lax.Precision.HIGHEST)
    y = y + conv_b.reshape(1, 1, C_enc, 1, 1)
    y = _gelu_tanh(y)
    y = jnp.transpose(y, (0, 2, 1, 3, 4))                             # (B, Ce, D, OH, OW)
    viewed = y.reshape(B, -1, fc_h, fc_w, D)
    return jnp.transpose(viewed, (0, 1, 4, 2, 3))


# -----------------------------------------------------------------------------
if __name__ == "__main__":
    # Small shapes: B=2, C=4 input channels, D=4 frames, 16x16 spatial, Ce=32.
    B, C, D, H, W = 2, 4, 4, 16, 16
    C_enc = 32
    fc_h, fc_w = 8, 8        # stride-2 conv: 16 / 2 = 8

    key = jax.random.PRNGKey(0)
    kx, kw, kb = jax.random.split(key, 3)
    x = jax.random.normal(kx, (B, C, D, H, W), dtype=jnp.float32)
    conv_w = 0.1 * jax.random.normal(kw, (C_enc, C, 1, 3, 3), dtype=jnp.float32)
    conv_b = 0.01 * jax.random.normal(kb, (C_enc,), dtype=jnp.float32)

    fwd = jax.jit(functools.partial(hdnerv3_encoder_forward, fc_h=fc_h, fc_w=fc_w))
    out = jax.block_until_ready(fwd(x, conv_w, conv_b))
    assert out.shape == (B, C_enc, D, fc_h, fc_w), out.shape

    ref = jax.block_until_ready(_reference_forward(x, conv_w, conv_b, fc_h, fc_w))
    max_err = float(jnp.abs(out - ref).max())
    assert jnp.allclose(out, ref, atol=1e-3, rtol=1e-3), max_err

    print("KERNEL_OK")
</pallas_src>

<mosaic_0001>
module attributes {stable_mosaic.version = 11 : i64} {
  func.func @kernel(%arg0: i32, %arg1: i32, %arg2: memref<1x4x16x138xbf16, #tpu.memory_space<vmem>>, %arg3: memref<32x36xbf16, #tpu.memory_space<vmem>>, %arg4: memref<32x1xf32, #tpu.memory_space<vmem>>, %arg5: memref<1x32x512xf32, #tpu.memory_space<vmem>>, %arg6: memref<36x512xbf16, #tpu.memory_space<vmem>>) attributes {dimension_semantics = [#tpu.dimension_semantics<parallel>, #tpu.dimension_semantics<parallel>], iteration_bounds = array<i64: 2, 1>, scalar_prefetch = 0 : i64, scratch_operands = 1 : i64, tpu.core_type = #tpu.core_type<tc>, window_params = [{transform_indices = @transform_0, window_bounds = array<i64: 1, 4, 16, 138>}, {pipeline_mode = #tpu.pipeline_mode<synchronous>, transform_indices = @transform_1, window_bounds = array<i64: 32, 36>}, {pipeline_mode = #tpu.pipeline_mode<synchronous>, transform_indices = @transform_2, window_bounds = array<i64: 32, 1>}, {transform_indices = @transform_3, window_bounds = array<i64: 1, 32, 512>}]} {
    %c0 = arith.constant 0 : index
    %c0_0 = arith.constant 0 : index
    %c0_1 = arith.constant 0 : index
    %c0_2 = arith.constant 0 : index
    %0 = vector.load %arg2[%c0, %c0_0, %c0_1, %c0_2] : memref<1x4x16x138xbf16, #tpu.memory_space<vmem>>, vector<1x1x4x128xbf16>
    %1 = vector.shape_cast %0 : vector<1x1x4x128xbf16> to vector<4x128xbf16>
    %c0_3 = arith.constant 0 : index
    %c0_4 = arith.constant 0 : index
    %2 = vector.load %arg6[%c0_3, %c0_4] : memref<36x512xbf16, #tpu.memory_space<vmem>>, vector<4x128xbf16>
    tpu.vector_store %arg6[%c0_3, %c0_4], %1 {strides = array<i32>} : memref<36x512xbf16, #tpu.memory_space<vmem>>, vector<4x128xbf16>,
    %c0_5 = arith.constant 0 : index
    %c0_6 = arith.constant 0 : index
    %c4 = arith.constant 4 : index
    %c0_7 = arith.constant 0 : index
    %3 = vector.load %arg2[%c0_5, %c0_6, %c4, %c0_7] : memref<1x4x16x138xbf16, #tpu.memory_space<vmem>>, vector<1x1x4x128xbf16>
    %4 = vector.shape_cast %3 : vector<1x1x4x128xbf16> to vector<4x128xbf16>
    %c4_8 = arith.constant 4 : index
    %c0_9 = arith.constant 0 : index
    %5 = vector.load %arg6[%c4_8, %c0_9] : memref<36x512xbf16, #tpu.memory_space<vmem>>, vector<4x128xbf16>
    tpu.vector_store %arg6[%c4_8, %c0_9], %4 {strides = array<i32>} : memref<36x512xbf16, #tpu.memory_space<vmem>>, vector<4x128xbf16>,
    %c0_10 = arith.constant 0 : index
    %c0_11 = arith.constant 0 : index
    %c0_12 = arith.constant 0 : index
    %c1 = arith.constant 1 : index
    %6 = vector.load %arg2[%c0_10, %c0_11, %c0_12, %c1] : memref<1x4x16x138xbf16, #tpu.memory_space<vmem>>, vector<1x1x4x128xbf16>
    %7 = vector.shape_cast %6 : vector<1x1x4x128xbf16> to vector<4x128xbf16>
    %c8 = arith.constant 8 : index
    %c0_13 = arith.constant 0 : index
    %8 = vector.load %arg6[%c8, %c0_13] : memref<36x512xbf16, #tpu.memory_space<vmem>>, vector<4x128xbf16>
    tpu.vector_store %arg6[%c8, %c0_13], %7 {strides = array<i32>} : memref<36x512xbf16, #tpu.memory_space<vmem>>, vector<4x128xbf16>,
    %c0_14 = arith.constant 0 : index
    %c0_15 = arith.constant 0 : index
    %c8_16 = arith.constant 8 : index
    %c0_17 = arith.constant 0 : index
    %9 = vector.load %arg2[%c0_14, %c0_15, %c8_16, %c0_17] : memref<1x4x16x138xbf16, #tpu.memory_space<vmem>>, vector<1x1x4x128xbf16>
    %10 = vector.shape_cast %9 : vector<1x1x4x128xbf16> to vector<4x128xbf16>
    %c12 = arith.constant 12 : index
    %c0_18 = arith.constant 0 : index
    %11 = vector.load %arg6[%c12, %c0_18] : memref<36x512xbf16, #tpu.memory_space<vmem>>, vector<4x128xbf16>
    tpu.vector_store %arg6[%c12, %c0_18], %10 {strides = array<i32>} : memref<36x512xbf16, #tpu.memory_space<vmem>>, vector<4x128xbf16>,
    %c0_19 = arith.constant 0 : index
    %c0_20 = arith.constant 0 : index
    %c12_21 = arith.constant 12 : index
    %c0_22 = arith.constant 0 : index
    %12 = vector.load %arg2[%c0_19, %c0_20, %c12_21, %c0_22] : memref<1x4x16x138xbf16, #tpu.memory_space<vmem>>, vector<1x1x4x128xbf16>
    %13 = vector.shape_cast %12 : vector<1x1x4x128xbf16> to vector<4x128xbf16>
    %c16 = arith.constant 16 : index
    %c0_23 = arith.constant 0 : index
    %14 = vector.load %arg6[%c16, %c0_23] : memref<36x512xbf16, #tpu.memory_space<vmem>>, vector<4x128xbf16>
    tpu.vector_store %arg6[%c16, %c0_23], %13 {strides = array<i32>} : memref<36x512xbf16, #tpu.memory_space<vmem>>, vector<4x128xbf16>,
    %c0_24 = arith.constant 0 : index
    %c0_25 = arith.constant 0 : index
    %c8_26 = arith.constant 8 : index
    %c1_27 = arith.constant 1 : index
    %15 = vector.load %arg2[%c0_24, %c0_25, %c8_26, %c1_27] : memref<1x4x16x138xbf16, #tpu.memory_space<vmem>>, vector<1x1x4x128xbf16>
    %16 = vector.shape_cast %15 : vector<1x1x4x128xbf16> to vector<4x128xbf16>
    %c20 = arith.constant 20 : index
    %c0_28 = arith.constant 0 : index
    %17 = vector.load %arg6[%c20, %c0_28] : memref<36x512xbf16, #tpu.memory_space<vmem>>, vector<4x128xbf16>
    tpu.vector_store %arg6[%c20, %c0_28], %16 {strides = array<i32>} : memref<36x512xbf16, #tpu.memory_space<vmem>>, vector<4x128xbf16>,
    %c0_29 = arith.constant 0 : index
    %c0_30 = arith.constant 0 : index
    %c0_31 = arith.constant 0 : index
    %c9 = arith.constant 9 : index
    %18 = vector.load %arg2[%c0_29, %c0_30, %c0_31, %c9] : memref<1x4x16x138xbf16, #tpu.memory_space<vmem>>, vector<1x1x4x128xbf16>
    %19 = vector.shape_cast %18 : vector<1x1x4x128xbf16> to vector<4x128xbf16>
    %c24 = arith.constant 24 : index
    %c0_32 = arith.constant 0 : index
    %20 = vector.load %arg6[%c24, %c0_32] : memref<36x512xbf16, #tpu.memory_space<vmem>>, vector<4x128xbf16>
    tpu.vector_store %arg6[%c24, %c0_32], %19 {strides = array<i32>} : memref<36x512xbf16, #tpu.memory_space<vmem>>, vector<4x128xbf16>,
    %c0_33 = arith.constant 0 : index
    %c0_34 = arith.constant 0 : index
    %c4_35 = arith.constant 4 : index
    %c9_36 = arith.constant 9 : index
    %21 = vector.load %arg2[%c0_33, %c0_34, %c4_35, %c9_36] : memref<1x4x16x138xbf16, #tpu.memory_space<vmem>>, vector<1x1x4x128xbf16>
    %22 = vector.shape_cast %21 : vector<1x1x4x128xbf16> to vector<4x128xbf16>
    %c28 = arith.constant 28 : index
    %c0_37 = arith.constant 0 : index
    %23 = vector.load %arg6[%c28, %c0_37] : memref<36x512xbf16, #tpu.memory_space<vmem>>, vector<4x128xbf16>
    tpu.vector_store %arg6[%c28, %c0_37], %22 {strides = array<i32>} : memref<36x512xbf16, #tpu.memory_space<vmem>>, vector<4x128xbf16>,
    %c0_38 = arith.constant 0 : index
    %c0_39 = arith.constant 0 : index
    %c0_40 = arith.constant 0 : index
    %c10 = arith.constant 10 : index
    %24 = vector.load %arg2[%c0_38, %c0_39, %c0_40, %c10] : memref<1x4x16x138xbf16, #tpu.memory_space<vmem>>, vector<1x1x4x128xbf16>
    %25 = vector.shape_cast %24 : vector<1x1x4x128xbf16> to vector<4x128xbf16>
    %c32 = arith.constant 32 : index
    %c0_41 = arith.constant 0 : index
    %26 = vector.load %arg6[%c32, %c0_41] : memref<36x512xbf16, #tpu.memory_space<vmem>>, vector<4x128xbf16>
    tpu.vector_store %arg6[%c32, %c0_41], %25 {strides = array<i32>} : memref<36x512xbf16, #tpu.memory_space<vmem>>, vector<4x128xbf16>,
    %c0_42 = arith.constant 0 : index
    %c1_43 = arith.constant 1 : index
    %c0_44 = arith.constant 0 : index
    %c0_45 = arith.constant 0 : index
    %27 = vector.load %arg2[%c0_42, %c1_43, %c0_44, %c0_45] : memref<1x4x16x138xbf16, #tpu.memory_space<vmem>>, vector<1x1x4x128xbf16>
    %28 = vector.shape_cast %27 : vector<1x1x4x128xbf16> to vector<4x128xbf16>
    %c0_46 = arith.constant 0 : index
    %c128 = arith.constant 128 : index
    %29 = vector.load %arg6[%c0_46, %c128] : memref<36x512xbf16, #tpu.memory_space<vmem>>, vector<4x128xbf16>
    tpu.vector_store %arg6[%c0_46, %c128], %28 {strides = array<i32>} : memref<36x512xbf16, #tpu.memory_space<vmem>>, vector<4x128xbf16>,
    %c0_47 = arith.constant 0 : index
    %c1_48 = arith.constant 1 : index
    %c4_49 = arith.constant 4 : index
    %c0_50 = arith.constant 0 : index
    %30 = vector.load %arg2[%c0_47, %c1_48, %c4_49, %c0_50] : memref<1x4x16x138xbf16, #tpu.memory_space<vmem>>, vector<1x1x4x128xbf16>
    %31 = vector.shape_cast %30 : vector<1x1x4x128xbf16> to vector<4x128xbf16>
    %c4_51 = arith.constant 4 : index
    %c128_52 = arith.constant 128 : index
    %32 = vector.load %arg6[%c4_51, %c128_52] : memref<36x512xbf16, #tpu.memory_space<vmem>>, vector<4x128xbf16>
    tpu.vector_store %arg6[%c4_51, %c128_52], %31 {strides = array<i32>} : memref<36x512xbf16, #tpu.memory_space<vmem>>, vector<4x128xbf16>,
    %c0_53 = arith.constant 0 : index
    %c1_54 = arith.constant 1 : index
    %c0_55 = arith.constant 0 : index
    %c1_56 = arith.constant 1 : index
    %33 = vector.load %arg2[%c0_53, %c1_54, %c0_55, %c1_56] : memref<1x4x16x138xbf16, #tpu.memory_space<vmem>>, vector<1x1x4x128xbf16>
    %34 = vector.shape_cast %33 : vector<1x1x4x128xbf16> to vector<4x128xbf16>
    %c8_57 = arith.constant 8 : index
    %c128_58 = arith.constant 128 : index
    %35 = vector.load %arg6[%c8_57, %c128_58] : memref<36x512xbf16, #tpu.memory_space<vmem>>, vector<4x128xbf16>
    tpu.vector_store %arg6[%c8_57, %c128_58], %34 {strides = array<i32>} : memref<36x512xbf16, #tpu.memory_space<vmem>>, vector<4x128xbf16>,
    %c0_59 = arith.constant 0 : index
    %c1_60 = arith.constant 1 : index
    %c8_61 = arith.constant 8 : index
    %c0_62 = arith.constant 0 : index
    %36 = vector.load %arg2[%c0_59, %c1_60, %c8_61, %c0_62] : memref<1x4x16x138xbf16, #tpu.memory_space<vmem>>, vector<1x1x4x128xbf16>
    %37 = vector.shape_cast %36 : vector<1x1x4x128xbf16> to vector<4x128xbf16>
    %c12_63 = arith.constant 12 : index
    %c128_64 = arith.constant 128 : index
    %38 = vector.load %arg6[%c12_63, %c128_64] : memref<36x512xbf16, #tpu.memory_space<vmem>>, vector<4x128xbf16>
    tpu.vector_store %arg6[%c12_63, %c128_64], %37 {strides = array<i32>} : memref<36x512xbf16, #tpu.memory_space<vmem>>, vector<4x128xbf16>,
    %c0_65 = arith.constant 0 : index
    %c1_66 = arith.constant 1 : index
    %c12_67 = arith.constant 12 : index
    %c0_68 = arith.constant 0 : index
    %39 = vector.load %arg2[%c0_65, %c1_66, %c12_67, %c0_68] : memref<1x4x16x138xbf16, #tpu.memory_space<vmem>>, vector<1x1x4x128xbf16>
    %40 = vector.shape_cast %39 : vector<1x1x4x128xbf16> to vector<4x128xbf16>
    %c16_69 = arith.constant 16 : index
    %c128_70 = arith.constant 128 : index
    %41 = vector.load %arg6[%c16_69, %c128_70] : memref<36x512xbf16, #tpu.memory_space<vmem>>, vector<4x128xbf16>
    tpu.vector_store %arg6[%c16_69, %c128_70], %40 {strides = array<i32>} : memref<36x512xbf16, #tpu.memory_space<vmem>>, vector<4x128xbf16>,
    %c0_71 = arith.constant 0 : index
    %c1_72 = arith.constant 1 : index
    %c8_73 = arith.constant 8 : index
    %c1_74 = arith.constant 1 : index
    %42 = vector.load %arg2[%c0_71, %c1_72, %c8_73, %c1_74] : memref<1x4x16x138xbf16, #tpu.memory_space<vmem>>, vector<1x1x4x128xbf16>
    %43 = vector.shape_cast %42 : vector<1x1x4x128xbf16> to vector<4x128xbf16>
    %c20_75 = arith.constant 20 : index
    %c128_76 = arith.constant 128 : index
    %44 = vector.load %arg6[%c20_75, %c128_76] : memref<36x512xbf16, #tpu.memory_space<vmem>>, vector<4x128xbf16>
    tpu.vector_store %arg6[%c20_75, %c128_76], %43 {strides = array<i32>} : memref<36x512xbf16, #tpu.memory_space<vmem>>, vector<4x128xbf16>,
    %c0_77 = arith.constant 0 : index
    %c1_78 = arith.constant 1 : index
    %c0_79 = arith.constant 0 : index
    %c9_80 = arith.constant 9 : index
    %45 = vector.load %arg2[%c0_77, %c1_78, %c0_79, %c9_80] : memref<1x4x16x138xbf16, #tpu.memory_space<vmem>>, vector<1x1x4x128xbf16>
    %46 = vector.shape_cast %45 : vector<1x1x4x128xbf16> to vector<4x128xbf16>
    %c24_81 = arith.constant 24 : index
    %c128_82 = arith.constant 128 : index
    %47 = vector.load %arg6[%c24_81, %c128_82] : memref<36x512xbf16, #tpu.memory_space<vmem>>, vector<4x128xbf16>
    tpu.vector_store %arg6[%c24_81, %c128_82], %46 {strides = array<i32>} : memref<36x512xbf16, #tpu.memory_space<vmem>>, vector<4x128xbf16>,
    %c0_83 = arith.constant 0 : index
    %c1_84 = arith.constant 1 : index
    %c4_85 = arith.constant 4 : index
    %c9_86 = arith.constant 9 : index
    %48 = vector.load %arg2[%c0_83, %c1_84, %c4_85, %c9_86] : memref<1x4x16x138xbf16, #tpu.memory_space<vmem>>, vector<1x1x4x128xbf16>
    %49 = vector.shape_cast %48 : vector<1x1x4x128xbf16> to vector<4x128xbf16>
    %c28_87 = arith.constant 28 : index
    %c128_88 = arith.constant 128 : index
    %50 = vector.load %arg6[%c28_87, %c128_88] : memref<36x512xbf16, #tpu.memory_space<vmem>>, vector<4x128xbf16>
    tpu.vector_store %arg6[%c28_87, %c128_88], %49 {strides = array<i32>} : memref<36x512xbf16, #tpu.memory_space<vmem>>, vector<4x128xbf16>,
    %c0_89 = arith.constant 0 : index
    %c1_90 = arith.constant 1 : index
    %c0_91 = arith.constant 0 : index
    %c10_92 = arith.constant 10 : index
    %51 = vector.load %arg2[%c0_89, %c1_90, %c0_91, %c10_92] : memref<1x4x16x138xbf16, #tpu.memory_space<vmem>>, vector<1x1x4x128xbf16>
    %52 = vector.shape_cast %51 : vector<1x1x4x128xbf16> to vector<4x128xbf16>
    %c32_93 = arith.constant 32 : index
    %c128_94 = arith.constant 128 : index
    %53 = vector.load %arg6[%c32_93, %c128_94] : memref<36x512xbf16, #tpu.memory_space<vmem>>, vector<4x128xbf16>
    tpu.vector_store %arg6[%c32_93, %c128_94], %52 {strides = array<i32>} : memref<36x512xbf16, #tpu.memory_space<vmem>>, vector<4x128xbf16>,
    %c0_95 = arith.constant 0 : index
    %c2 = arith.constant 2 : index
    %c0_96 = arith.constant 0 : index
    %c0_97 = arith.constant 0 : index
    %54 = vector.load %arg2[%c0_95, %c2, %c0_96, %c0_97] : memref<1x4x16x138xbf16, #tpu.memory_space<vmem>>, vector<1x1x4x128xbf16>
    %55 = vector.shape_cast %54 : vector<1x1x4x128xbf16> to vector<4x128xbf16>
    %c0_98 = arith.constant 0 : index
    %c256 = arith.constant 256 : index
    %56 = vector.load %arg6[%c0_98, %c256] : memref<36x512xbf16, #tpu.memory_space<vmem>>, vector<4x128xbf16>
    tpu.vector_store %arg6[%c0_98, %c256], %55 {strides = array<i32>} : memref<36x512xbf16, #tpu.memory_space<vmem>>, vector<4x128xbf16>,
    %c0_99 = arith.constant 0 : index
    %c2_100 = arith.constant 2 : index
    %c4_101 = arith.constant 4 : index
    %c0_102 = arith.constant 0 : index
    %57 = vector.load %arg2[%c0_99, %c2_100, %c4_101, %c0_102] : memref<1x4x16x138xbf16, #tpu.memory_space<vmem>>, vector<1x1x4x128xbf16>
    %58 = vector.shape_cast %57 : vector<1x1x4x128xbf16> to vector<4x128xbf16>
    %c4_103 = arith.constant 4 : index
    %c256_104 = arith.constant 256 : index
    %59 = vector.load %arg6[%c4_103, %c256_104] : memref<36x512xbf16, #tpu.memory_space<vmem>>, vector<4x128xbf16>
    tpu.vector_store %arg6[%c4_103, %c256_104], %58 {strides = array<i32>} : memref<36x512xbf16, #tpu.memory_space<vmem>>, vector<4x128xbf16>,
    %c0_105 = arith.constant 0 : index
    %c2_106 = arith.constant 2 : index
    %c0_107 = arith.constant 0 : index
    %c1_108 = arith.constant 1 : index
    %60 = vector.load %arg2[%c0_105, %c2_106, %c0_107, %c1_108] : memref<1x4x16x138xbf16, #tpu.memory_space<vmem>>, vector<1x1x4x128xbf16>
    %61 = vector.shape_cast %60 : vector<1x1x4x128xbf16> to vector<4x128xbf16>
    %c8_109 = arith.constant 8 : index
    %c256_110 = arith.constant 256 : index
    %62 = vector.load %arg6[%c8_109, %c256_110] : memref<36x512xbf16, #tpu.memory_space<vmem>>, vector<4x128xbf16>
    tpu.vector_store %arg6[%c8_109, %c256_110], %61 {strides = array<i32>} : memref<36x512xbf16, #tpu.memory_space<vmem>>, vector<4x128xbf16>,
    %c0_111 = arith.constant 0 : index
    %c2_112 = arith.constant 2 : index
    %c8_113 = arith.constant 8 : index
    %c0_114 = arith.constant 0 : index
    %63 = vector.load %arg2[%c0_111, %c2_112, %c8_113, %c0_114] : memref<1x4x16x138xbf16, #tpu.memory_space<vmem>>, vector<1x1x4x128xbf16>
    %64 = vector.shape_cast %63 : vector<1x1x4x128xbf16> to vector<4x128xbf16>
    %c12_115 = arith.constant 12 : index
    %c256_116 = arith.constant 256 : index
    %65 = vector.load %arg6[%c12_115, %c256_116] : memref<36x512xbf16, #tpu.memory_space<vmem>>, vector<4x128xbf16>
    tpu.vector_store %arg6[%c12_115, %c256_116], %64 {strides = array<i32>} : memref<36x512xbf16, #tpu.memory_space<vmem>>, vector<4x128xbf16>,
    %c0_117 = arith.constant 0 : index
    %c2_118 = arith.constant 2 : index
    %c12_119 = arith.constant 12 : index
    %c0_120 = arith.constant 0 : index
    %66 = vector.load %arg2[%c0_117, %c2_118, %c12_119, %c0_120] : memref<1x4x16x138xbf16, #tpu.memory_space<vmem>>, vector<1x1x4x128xbf16>
    %67 = vector.shape_cast %66 : vector<1x1x4x128xbf16> to vector<4x128xbf16>
    %c16_121 = arith.constant 16 : index
    %c256_122 = arith.constant 256 : index
    %68 = vector.load %arg6[%c16_121, %c256_122] : memref<36x512xbf16, #tpu.memory_space<vmem>>, vector<4x128xbf16>
    tpu.vector_store %arg6[%c16_121, %c256_122], %67 {strides = array<i32>} : memref<36x512xbf16, #tpu.memory_space<vmem>>, vector<4x128xbf16>,
    %c0_123 = arith.constant 0 : index
    %c2_124 = arith.constant 2 : index
    %c8_125 = arith.constant 8 : index
    %c1_126 = arith.constant 1 : index
    %69 = vector.load %arg2[%c0_123, %c2_124, %c8_125, %c1_126] : memref<1x4x16x138xbf16, #tpu.memory_space<vmem>>, vector<1x1x4x128xbf16>
    %70 = vector.shape_cast %69 : vector<1x1x4x128xbf16> to vector<4x128xbf16>
    %c20_127 = arith.constant 20 : index
    %c256_128 = arith.constant 256 : index
    %71 = vector.load %arg6[%c20_127, %c256_128] : memref<36x512xbf16, #tpu.memory_space<vmem>>, vector<4x128xbf16>
    tpu.vector_store %arg6[%c20_127, %c256_128], %70 {strides = array<i32>} : memref<36x512xbf16, #tpu.memory_space<vmem>>, vector<4x128xbf16>,
    %c0_129 = arith.constant 0 : index
    %c2_130 = arith.constant 2 : index
    %c0_131 = arith.constant 0 : index
    %c9_132 = arith.constant 9 : index
    %72 = vector.load %arg2[%c0_129, %c2_130, %c0_131, %c9_132] : memref<1x4x16x138xbf16, #tpu.memory_space<vmem>>, vector<1x1x4x128xbf16>
    %73 = vector.shape_cast %72 : vector<1x1x4x128xbf16> to vector<4x128xbf16>
    %c24_133 = arith.constant 24 : index
    %c256_134 = arith.constant 256 : index
    %74 = vector.load %arg6[%c24_133, %c256_134] : memref<36x512xbf16, #tpu.memory_space<vmem>>, vector<4x128xbf16>
    tpu.vector_store %arg6[%c24_133, %c256_134], %73 {strides = array<i32>} : memref<36x512xbf16, #tpu.memory_space<vmem>>, vector<4x128xbf16>,
    %c0_135 = arith.constant 0 : index
    %c2_136 = arith.constant 2 : index
    %c4_137 = arith.constant 4 : index
    %c9_138 = arith.constant 9 : index
    %75 = vector.load %arg2[%c0_135, %c2_136, %c4_137, %c9_138] : memref<1x4x16x138xbf16, #tpu.memory_space<vmem>>, vector<1x1x4x128xbf16>
    %76 = vector.shape_cast %75 : vector<1x1x4x128xbf16> to vector<4x128xbf16>
    %c28_139 = arith.constant 28 : index
    %c256_140 = arith.constant 256 : index
    %77 = vector.load %arg6[%c28_139, %c256_140] : memref<36x512xbf16, #tpu.memory_space<vmem>>, vector<4x128xbf16>
    tpu.vector_store %arg6[%c28_139, %c256_140], %76 {strides = array<i32>} : memref<36x512xbf16, #tpu.memory_space<vmem>>, vector<4x128xbf16>,
    %c0_141 = arith.constant 0 : index
    %c2_142 = arith.constant 2 : index
    %c0_143 = arith.constant 0 : index
    %c10_144 = arith.constant 10 : index
    %78 = vector.load %arg2[%c0_141, %c2_142, %c0_143, %c10_144] : memref<1x4x16x138xbf16, #tpu.memory_space<vmem>>, vector<1x1x4x128xbf16>
    %79 = vector.shape_cast %78 : vector<1x1x4x128xbf16> to vector<4x128xbf16>
    %c32_145 = arith.constant 32 : index
    %c256_146 = arith.constant 256 : index
    %80 = vector.load %arg6[%c32_145, %c256_146] : memref<36x512xbf16, #tpu.memory_space<vmem>>, vector<4x128xbf16>
    tpu.vector_store %arg6[%c32_145, %c256_146], %79 {strides = array<i32>} : memref<36x512xbf16, #tpu.memory_space<vmem>>, vector<4x128xbf16>,
    %c0_147 = arith.constant 0 : index
    %c3 = arith.constant 3 : index
    %c0_148 = arith.constant 0 : index
    %c0_149 = arith.constant 0 : index
    %81 = vector.load %arg2[%c0_147, %c3, %c0_148, %c0_149] : memref<1x4x16x138xbf16, #tpu.memory_space<vmem>>, vector<1x1x4x128xbf16>
    %82 = vector.shape_cast %81 : vector<1x1x4x128xbf16> to vector<4x128xbf16>
    %c0_150 = arith.constant 0 : index
    %c384 = arith.constant 384 : index
    %83 = vector.load %arg6[%c0_150, %c384] : memref<36x512xbf16, #tpu.memory_space<vmem>>, vector<4x128xbf16>
    tpu.vector_store %arg6[%c0_150, %c384], %82 {strides = array<i32>} : memref<36x512xbf16, #tpu.memory_space<vmem>>, vector<4x128xbf16>,
    %c0_151 = arith.constant 0 : index
    %c3_152 = arith.constant 3 : index
    %c4_153 = arith.constant 4 : index
    %c0_154 = arith.constant 0 : index
    %84 = vector.load %arg2[%c0_151, %c3_152, %c4_153, %c0_154] : memref<1x4x16x138xbf16, #tpu.memory_space<vmem>>, vector<1x1x4x128xbf16>
    %85 = vector.shape_cast %84 : vector<1x1x4x128xbf16> to vector<4x128xbf16>
    %c4_155 = arith.constant 4 : index
    %c384_156 = arith.constant 384 : index
    %86 = vector.load %arg6[%c4_155, %c384_156] : memref<36x512xbf16, #tpu.memory_space<vmem>>, vector<4x128xbf16>
    tpu.vector_store %arg6[%c4_155, %c384_156], %85 {strides = array<i32>} : memref<36x512xbf16, #tpu.memory_space<vmem>>, vector<4x128xbf16>,
    %c0_157 = arith.constant 0 : index
    %c3_158 = arith.constant 3 : index
    %c0_159 = arith.constant 0 : index
    %c1_160 = arith.constant 1 : index
    %87 = vector.load %arg2[%c0_157, %c3_158, %c0_159, %c1_160] : memref<1x4x16x138xbf16, #tpu.memory_space<vmem>>, vector<1x1x4x128xbf16>
    %88 = vector.shape_cast %87 : vector<1x1x4x128xbf16> to vector<4x128xbf16>
    %c8_161 = arith.constant 8 : index
    %c384_162 = arith.constant 384 : index
    %89 = vector.load %arg6[%c8_161, %c384_162] : memref<36x512xbf16, #tpu.memory_space<vmem>>, vector<4x128xbf16>
    tpu.vector_store %arg6[%c8_161, %c384_162], %88 {strides = array<i32>} : memref<36x512xbf16, #tpu.memory_space<vmem>>, vector<4x128xbf16>,
    %c0_163 = arith.constant 0 : index
    %c3_164 = arith.constant 3 : index
    %c8_165 = arith.constant 8 : index
    %c0_166 = arith.constant 0 : index
    %90 = vector.load %arg2[%c0_163, %c3_164, %c8_165, %c0_166] : memref<1x4x16x138xbf16, #tpu.memory_space<vmem>>, vector<1x1x4x128xbf16>
    %91 = vector.shape_cast %90 : vector<1x1x4x128xbf16> to vector<4x128xbf16>
    %c12_167 = arith.constant 12 : index
    %c384_168 = arith.constant 384 : index
    %92 = vector.load %arg6[%c12_167, %c384_168] : memref<36x512xbf16, #tpu.memory_space<vmem>>, vector<4x128xbf16>
    tpu.vector_store %arg6[%c12_167, %c384_168], %91 {strides = array<i32>} : memref<36x512xbf16, #tpu.memory_space<vmem>>, vector<4x128xbf16>,
    %c0_169 = arith.constant 0 : index
    %c3_170 = arith.constant 3 : index
    %c12_171 = arith.constant 12 : index
    %c0_172 = arith.constant 0 : index
    %93 = vector.load %arg2[%c0_169, %c3_170, %c12_171, %c0_172] : memref<1x4x16x138xbf16, #tpu.memory_space<vmem>>, vector<1x1x4x128xbf16>
    %94 = vector.shape_cast %93 : vector<1x1x4x128xbf16> to vector<4x128xbf16>
    %c16_173 = arith.constant 16 : index
    %c384_174 = arith.constant 384 : index
    %95 = vector.load %arg6[%c16_173, %c384_174] : memref<36x512xbf16, #tpu.memory_space<vmem>>, vector<4x128xbf16>
    tpu.vector_store %arg6[%c16_173, %c384_174], %94 {strides = array<i32>} : memref<36x512xbf16, #tpu.memory_space<vmem>>, vector<4x128xbf16>,
    %c0_175 = arith.constant 0 : index
    %c3_176 = arith.constant 3 : index
    %c8_177 = arith.constant 8 : index
    %c1_178 = arith.constant 1 : index
    %96 = vector.load %arg2[%c0_175, %c3_176, %c8_177, %c1_178] : memref<1x4x16x138xbf16, #tpu.memory_space<vmem>>, vector<1x1x4x128xbf16>
    %97 = vector.shape_cast %96 : vector<1x1x4x128xbf16> to vector<4x128xbf16>
    %c20_179 = arith.constant 20 : index
    %c384_180 = arith.constant 384 : index
    %98 = vector.load %arg6[%c20_179, %c384_180] : memref<36x512xbf16, #tpu.memory_space<vmem>>, vector<4x128xbf16>
    tpu.vector_store %arg6[%c20_179, %c384_180], %97 {strides = array<i32>} : memref<36x512xbf16, #tpu.memory_space<vmem>>, vector<4x128xbf16>,
    %c0_181 = arith.constant 0 : index
    %c3_182 = arith.constant 3 : index
    %c0_183 = arith.constant 0 : index
    %c9_184 = arith.constant 9 : index
    %99 = vector.load %arg2[%c0_181, %c3_182, %c0_183, %c9_184] : memref<1x4x16x138xbf16, #tpu.memory_space<vmem>>, vector<1x1x4x128xbf16>
    %100 = vector.shape_cast %99 : vector<1x1x4x128xbf16> to vector<4x128xbf16>
    %c24_185 = arith.constant 24 : index
    %c384_186 = arith.constant 384 : index
    %101 = vector.load %arg6[%c24_185, %c384_186] : memref<36x512xbf16, #tpu.memory_space<vmem>>, vector<4x128xbf16>
    tpu.vector_store %arg6[%c24_185, %c384_186], %100 {strides = array<i32>} : memref<36x512xbf16, #tpu.memory_space<vmem>>, vector<4x128xbf16>,
    %c0_187 = arith.constant 0 : index
    %c3_188 = arith.constant 3 : index
    %c4_189 = arith.constant 4 : index
    %c9_190 = arith.constant 9 : index
    %102 = vector.load %arg2[%c0_187, %c3_188, %c4_189, %c9_190] : memref<1x4x16x138xbf16, #tpu.memory_space<vmem>>, vector<1x1x4x128xbf16>
    %103 = vector.shape_cast %102 : vector<1x1x4x128xbf16> to vector<4x128xbf16>
    %c28_191 = arith.constant 28 : index
    %c384_192 = arith.constant 384 : index
    %104 = vector.load %arg6[%c28_191, %c384_192] : memref<36x512xbf16, #tpu.memory_space<vmem>>, vector<4x128xbf16>
    tpu.vector_store %arg6[%c28_191, %c384_192], %103 {strides = array<i32>} : memref<36x512xbf16, #tpu.memory_space<vmem>>, vector<4x128xbf16>,
    %c0_193 = arith.constant 0 : index
    %c3_194 = arith.constant 3 : index
    %c0_195 = arith.constant 0 : index
    %c10_196 = arith.constant 10 : index
    %105 = vector.load %arg2[%c0_193, %c3_194, %c0_195, %c10_196] : memref<1x4x16x138xbf16, #tpu.memory_space<vmem>>, vector<1x1x4x128xbf16>
    %106 = vector.shape_cast %105 : vector<1x1x4x128xbf16> to vector<4x128xbf16>
    %c32_197 = arith.constant 32 : index
    %c384_198 = arith.constant 384 : index
    %107 = vector.load %arg6[%c32_197, %c384_198] : memref<36x512xbf16, #tpu.memory_space<vmem>>, vector<4x128xbf16>
    tpu.vector_store %arg6[%c32_197, %c384_198], %106 {strides = array<i32>} : memref<36x512xbf16, #tpu.memory_space<vmem>>, vector<4x128xbf16>,
    %c0_199 = arith.constant 0 : index
    %c0_200 = arith.constant 0 : index
    %108 = vector.load %arg3[%c0_199, %c0_200] : memref<32x36xbf16, #tpu.memory_space<vmem>>, vector<32x36xbf16>
    %c0_201 = arith.constant 0 : index
    %c0_202 = arith.constant 0 : index
    %109 = vector.load %arg6[%c0_201, %c0_202] : memref<36x512xbf16, #tpu.memory_space<vmem>>, vector<36x512xbf16>
    %cst = arith.constant dense<0.000000e+00> : vector<32x512xf32>
    %110 = tpu.matmul %108, %109, %cst {dimension_numbers = #tpu.dot_dimension_numbers<[1], [0], [0], [1], [0, 0, 1, 1], [], []>} : vector<32x36xbf16>, vector<36x512xbf16>, vector<32x512xf32> -> vector<32x512xf32>
    %c0_203 = arith.constant 0 : index
    %c0_204 = arith.constant 0 : index
    %111 = vector.load %arg4[%c0_203, %c0_204] : memref<32x1xf32, #tpu.memory_space<vmem>>, vector<32x1xf32>
    %112 = vector.broadcast %111 : vector<32x1xf32> to vector<32x512xf32>
    %113 = arith.addf %110, %112 : vector<32x512xf32>
    %cst_205 = arith.constant 5.000000e-01 : f32
    %114 = vector.broadcast %cst_205 : f32 to vector<32x512xf32>
    %115 = arith.mulf %114, %113 : vector<32x512xf32>
    %cst_206 = arith.constant 4.471500e-02 : f32
    %116 = vector.broadcast %cst_206 : f32 to vector<32x512xf32>
    %117 = arith.mulf %116, %113 : vector<32x512xf32>
    %118 = arith.mulf %117, %113 : vector<32x512xf32>
    %119 = arith.mulf %118, %113 : vector<32x512xf32>
    %120 = arith.addf %113, %119 : vector<32x512xf32>
    %cst_207 = arith.constant 0.797884583 : f32
    %121 = vector.broadcast %cst_207 : f32 to vector<32x512xf32>
    %122 = arith.mulf %121, %120 : vector<32x512xf32>
    %123 = math.tanh %122 : vector<32x512xf32>
    %cst_208 = arith.constant 1.000000e+00 : f32
    %124 = vector.broadcast %cst_208 : f32 to vector<32x512xf32>
    %125 = arith.addf %124, %123 : vector<32x512xf32>
    %126 = arith.mulf %115, %125 : vector<32x512xf32>
    %c0_209 = arith.constant 0 : index
    %c0_210 = arith.constant 0 : index
    %c0_211 = arith.constant 0 : index
    %127 = vector.load %arg5[%c0_209, %c0_210, %c0_211] : memref<1x32x512xf32, #tpu.memory_space<vmem>>, vector<1x32x512xf32>
    %128 = vector.shape_cast %127 : vector<1x32x512xf32> to vector<32x512xf32>
    %129 = vector.shape_cast %126 : vector<32x512xf32> to vector<1x32x512xf32>
    tpu.vector_store %arg5[%c0_209, %c0_210, %c0_211], %129 {strides = array<i32>} : memref<1x32x512xf32, #tpu.memory_space<vmem>>, vector<1x32x512xf32>,
    return
  }
  func.func @transform_0(%arg0: i32, %arg1: i32) -> (i32, i32, i32, i32) {
    %c0_i32 = arith.constant 0 : i32
    %c0_i32_0 = arith.constant 0 : i32
    %c0_i32_1 = arith.constant 0 : i32
    return %arg0, %arg1, %c0_i32, %c0_i32_0 : i32, i32, i32, i32
  }
  func.func @transform_1(%arg0: i32, %arg1: i32) -> (i32, i32) {
    %c0_i32 = arith.constant 0 : i32
    %c0_i32_0 = arith.constant 0 : i32
    %c0_i32_1 = arith.constant 0 : i32
    return %c0_i32, %c0_i32_0 : i32, i32
  }
  func.func @transform_2(%arg0: i32, %arg1: i32) -> (i32, i32) {
    %c0_i32 = arith.constant 0 : i32
    %c0_i32_0 = arith.constant 0 : i32
    %c0_i32_1 = arith.constant 0 : i32
    return %c0_i32, %c0_i32_0 : i32, i32
  }
  func.func @transform_3(%arg0: i32, %arg1: i32) -> (i32, i32, i32) {
    %c0_i32 = arith.constant 0 : i32
    %c0_i32_0 = arith.constant 0 : i32
    return %arg0, %c0_i32, %arg1 : i32, i32, i32
  }
}

</mosaic_0001>

<llo_original>
// kernel: hdnerv3_encoder_forward.1
$region0: #{hdnerv3_encoder_forward.1}
  #allocation0 [shape = 'u32[]', space=smem, size = 0x4, offset = 0x4, fixed_abs, tag = 'smem constant byte address 0x4 - core index']
  #allocation1 [shape = 'u32[144,128]{1,0:T(1,128)}', space=vmem, size = 0x12000, scoped, tag = 'internal scratch']
  #allocation2 [shape = 'bf16[36,512]{1,0:T(8,128)(2,1)}', space=vmem, size = 0xa000, scoped, tag = 'scratch operand']
  %s0 = inlined_call_operand.vmem [shape: bf16[2,4,16,138], index: 0, kind: input, shape index: {}]
  %s1 = inlined_call_operand.vmem [shape: bf16[32,36], index: 1, kind: input, shape index: {}]
  %s2 = inlined_call_operand.vmem [shape: f32[32,1], index: 2, kind: input, shape index: {}]
  %s3 = inlined_call_operand.vmem [shape: f32[2,32,512], index: 3, kind: output, shape index: {}]
  %s4 = sld [smem:[#allocation0]]
  $region45: #{hdnerv3_encoder_forward.1} parent=0
    _
  %s6 = ssub.s32 1, %s4
  %s7 = scalar_select 0, %s6, %s4
  loop: start=0, step=1, limit=4
  $region2: #{hdnerv3_encoder_forward.1} parent=0 // loop_pre_header
    _
  $region3: #{hdnerv3_encoder_forward.1} parent=0 // loop_header
    %s9 = sphi 0, %s13
    %p10 = scmp.ge.s32.totalorder %s9, 4
    %s16 = sphi 0, %s28
    %s17 = sphi 0, %s24
    %s18 = sphi 0, %s16
    %s19 = sphi 0, %s17
    %s20 = sphi 0, %s18
    %s21 = sphi 0, %s19
    %s33 = sphi 0, %s35
    %s36 = sphi 0, %s33
    %s37 = sphi 0, %s36
    %s53 = sphi 0, %s37
    %s57 = sphi 0, %s57
    %s59 = sphi 0, %s57
    %s60 = sphi 0, %s59
    %s74 = sphi 0, %s60
    %s78 = sphi 0, %s78
    %s80 = sphi 0, %s78
    %s81 = sphi 0, %s80
    %s95 = sphi 0, %s81
    %s103 = sphi 0, %s105
    %s106 = sphi 0, %s103
    %s107 = sphi 0, %s106
    %s123 = sphi 0, %s107
  $region4: #{hdnerv3_encoder_forward.1} parent=0 // loop_header_branch
    %12 = sbr.rel (%p10) target = $region8
  $region5: #{hdnerv3_encoder_forward.1} parent=0 // loop_body
    %s14 = ssub.s32 %s9, 1
    %s15 = ssub.s32 %s9, 2
    %s22 = sadd.s32 1, %s17
    %p23 = scmp.ge.s32.totalorder %s22, 1
    %s24 = scalar_select %p23, 0, %s22
    %s25 = sadd.s32 1, %s16
    %s26 = scalar_select %p23, %s25, %s16
    %p27 = scmp.ge.s32.totalorder %s26, 2
    %s28 = scalar_select %p27, 0, %s26
    %s29 = ssub.s32 %s16, %s28
    %s30 = ssub.s32 %s17, %s24
    %s31 = sor.u32 %s29, %s30
    %p32 = scmp.eq.s32.totalorder %s31, 0
    %s34 = sadd.s32 %s33, 1
    %s35 = scalar_select %p32, %s33, %s34
    %p38 = pneg %p32
    %p39 = scmp.eq.s32.totalorder %s9, 1
    %p40 = por %p38, %p39
    %p41 = scmp.ne.s32.totalorder %s33, %s36
    %p42 = scmp.eq.s32.totalorder %s9, 0
    %p43 = por %p41, %p42
    %p44 = scmp.ne.s32.totalorder %s33, %s36
    %p45 = scmp.eq.s32.totalorder %s14, 1
    %p46 = por %p44, %p45
    %p47 = scmp.ne.s32.totalorder %s36, %s37
    %p48 = scmp.eq.s32.totalorder %s14, 0
    %p49 = por %p47, %p48
    %p50 = scmp.ne.s32.totalorder %s36, %s37
    %p51 = scmp.eq.s32.totalorder %s15, 1
    %p52 = por %p50, %p51
    %p54 = scmp.ne.s32.totalorder %s37, %s53
    %p55 = scmp.eq.s32.totalorder %s15, 0
    %p56 = por %p54, %p55
    %s58 = sadd.s32 %s57, 1
    %p61 = scmp.eq.s32.totalorder %s9, 1
    %p62 = scmp.ne.s32.totalorder %s57, %s59
    %p63 = scmp.eq.s32.totalorder %s9, 0
    %p64 = por %p62, %p63
    %p65 = scmp.ne.s32.totalorder %s57, %s59
    %p66 = scmp.eq.s32.totalorder %s14, 1
    %p67 = por %p65, %p66
    %p68 = scmp.ne.s32.totalorder %s59, %s60
    %p69 = scmp.eq.s32.totalorder %s14, 0
    %p70 = por %p68, %p69
    %p71 = scmp.ne.s32.totalorder %s59, %s60
    %p72 = scmp.eq.s32.totalorder %s15, 1
    %p73 = por %p71, %p72
    %p75 = scmp.ne.s32.totalorder %s60, %s74
    %p76 = scmp.eq.s32.totalorder %s15, 0
    %p77 = por %p75, %p76
    %s79 = sadd.s32 %s78, 1
    %p82 = scmp.eq.s32.totalorder %s9, 1
    %p83 = scmp.ne.s32.totalorder %s78, %s80
    %p84 = scmp.eq.s32.totalorder %s9, 0
    %p85 = por %p83, %p84
    %p86 = scmp.ne.s32.totalorder %s78, %s80
    %p87 = scmp.eq.s32.totalorder %s14, 1
    %p88 = por %p86, %p87
    %p89 = scmp.ne.s32.totalorder %s80, %s81
    %p90 = scmp.eq.s32.totalorder %s14, 0
    %p91 = por %p89, %p90
    %p92 = scmp.ne.s32.totalorder %s80, %s81
    %p93 = scmp.eq.s32.totalorder %s15, 1
    %p94 = por %p92, %p93
    %p96 = scmp.ne.s32.totalorder %s81, %s95
    %p97 = scmp.eq.s32.totalorder %s15, 0
    %p98 = por %p96, %p97
    %s99 = ssub.s32 %s16, %s28
    %s100 = ssub.s32 %s17, %s24
    %s101 = sor.u32 %s99, %s100
    %p102 = scmp.eq.s32.totalorder %s101, 0
    %s104 = sadd.s32 %s103, 1
    %s105 = scalar_select %p102, %s103, %s104
    %p108 = pneg %p102
    %p109 = scmp.eq.s32.totalorder %s9, 1
    %p110 = por %p108, %p109
    %p111 = scmp.ne.s32.totalorder %s103, %s106
    %p112 = scmp.eq.s32.totalorder %s9, 0
    %p113 = por %p111, %p112
    %p114 = scmp.ne.s32.totalorder %s103, %s106
    %p115 = scmp.eq.s32.totalorder %s14, 1
    %p116 = por %p114, %p115
    %p117 = scmp.ne.s32.totalorder %s106, %s107
    %p118 = scmp.eq.s32.totalorder %s14, 0
    %p119 = por %p117, %p118
    %p120 = scmp.ne.s32.totalorder %s106, %s107
    %p121 = scmp.eq.s32.totalorder %s15, 1
    %p122 = por %p120, %p121
    %p124 = scmp.ne.s32.totalorder %s107, %s123
    %p125 = scmp.eq.s32.totalorder %s15, 0
    %p126 = por %p124, %p125
    %p127 = scmp.le.s32.totalorder 1, %s9
    %p128 = scmp.lt.s32.totalorder %s9, 3
    %p129 = pnand %p127, %p128
    %p130 = pneg %p129
    // Predicated region
    $region9: #{hdnerv3_encoder_forward.1} parent=5 // pred_check
      _
    $region10: #{hdnerv3_encoder_forward.1} parent=5 // pred_check_branch
      %132 = sbr.rel (%p129) target = $region12
    $region11: #{hdnerv3_encoder_forward.1} parent=5 // pred_region
      %s133 = ssub.s32 %s9, 1
      // Predicated region
      $region13: #{hdnerv3_encoder_forward.1} parent=11 // pred_check
        %p134 = pneg %p70
      $region14: #{hdnerv3_encoder_forward.1} parent=11 // pred_check_branch
        %136 = sbr.rel (%p134) target = $region16
      $region15: #{hdnerv3_encoder_forward.1} parent=11 // pred_region
        _
      $region16: #{hdnerv3_encoder_forward.1} parent=11 // pred_fallthru
        _
      // Predicated region
      $region17: #{hdnerv3_encoder_forward.1} parent=11 // pred_check
        %p137 = pneg %p91
      $region18: #{hdnerv3_encoder_forward.1} parent=11 // pred_check_branch
        %139 = sbr.rel (%p137) target = $region20
      $region19: #{hdnerv3_encoder_forward.1} parent=11 // pred_region
        _
      $region20: #{hdnerv3_encoder_forward.1} parent=11 // pred_fallthru
        _
    $region12: #{hdnerv3_encoder_forward.1} parent=5 // pred_fallthru
      _
    %p140 = scmp.lt.s32.totalorder %s9, 2
    // Predicated region
    $region21: #{hdnerv3_encoder_forward.1} parent=5 // pred_check
      %p141 = pneg %p140
    $region22: #{hdnerv3_encoder_forward.1} parent=5 // pred_check_branch
      %143 = sbr.rel (%p141) target = $region24
    $region23: #{hdnerv3_encoder_forward.1} parent=5 // pred_region
      // Predicated region
      $region25: #{hdnerv3_encoder_forward.1} parent=23 // pred_check
        %p144 = pneg %p43
      $region26: #{hdnerv3_encoder_forward.1} parent=23 // pred_check_branch
        %146 = sbr.rel (%p144) target = $region28
      $region27: #{hdnerv3_encoder_forward.1} parent=23 // pred_region
        %s147 = smul.u32 4, %s17
        %p148 = scmp.lt.s32.totalorder %s16, 1
        %s149 = scalar_select %p148, %s16, 1
        %p150 = scmp.lt.s32.totalorder %s147, 3
        %s151 = scalar_select %p150, %s147, 3
        %s152 = smul.addr %s151, 4
        %s153 = smul.addr %s149, 16
        %s154 = sadd.s32 %s152, %s153
        %s155 = smul.addr %s154, 4
        %s156 = scalar_lea.vmem %s0, %s155
        %s157 = smul.u32 4, %s17
      $region28: #{hdnerv3_encoder_forward.1} parent=23 // pred_fallthru
        _
    $region24: #{hdnerv3_encoder_forward.1} parent=5 // pred_fallthru
      _
    %p158 = scmp.le.s32.totalorder 1, %s9
    %p159 = scmp.lt.s32.totalorder %s9, 3
    %p160 = pnand %p158, %p159
    %p161 = pneg %p160
    // Predicated region
    $region29: #{hdnerv3_encoder_forward.1} parent=5 // pred_check
      _
    $region30: #{hdnerv3_encoder_forward.1} parent=5 // pred_check_branch
      %163 = sbr.rel (%p160) target = $region32
    $region31: #{hdnerv3_encoder_forward.1} parent=5 // pred_region
      %s164 = ssub.s32 %s9, 1
      %s165 = smul.u32 4, %s19
      %p166 = scmp.lt.s32.totalorder %s18, 1
      %s167 = scalar_select %p166, %s18, 1
      %p168 = scmp.lt.s32.totalorder %s165, 3
      %s169 = scalar_select %p168, %s165, 3
      %s170 = smul.addr %s169, 4
      %s171 = smul.addr %s167, 16
      %s172 = sadd.s32 %s170, %s171
      %s173 = smul.addr %s172, 4
      %s174 = scalar_lea.vmem %s0, %s173
      %p175 = pneg %p49
      %p176 = pneg %p46
      %p177 = pneg %p70
      %p178 = pneg %p67
      %p179 = pneg %p91
      %p180 = pneg %p88
      %p181 = pneg %p119
      %p182 = pneg %p116
      %s183 = smul.u32 4, %s19
      %p184 = scmp.lt.s32.totalorder %s18, 1
      %s185 = scalar_select %p184, %s18, 1
      %p186 = scmp.lt.s32.totalorder %s183, 3
      %s187 = scalar_select %p186, %s183, 3
      %s188 = smul.addr %s185, 16
      %s189 = sadd.s32 %s187, %s188
      %s190 = smul.addr %s189, 8
      %s191 = scalar_lea.vmem %s3, %s190
      %s192 = smul.u32 4, %s19
      %p193 = scmp.lt.s32.totalorder %s18, 1
      %s194 = scalar_select %p193, %s18, 1
      %p195 = scmp.lt.s32.totalorder %s192, 3
      %s196 = scalar_select %p195, %s192, 3
      %s197 = smul.addr %s196, 4
      %s198 = smul.addr %s194, 16
      %s199 = sadd.s32 %s197, %s198
      %s200 = smul.addr %s199, 4
      %s201 = scalar_lea.vmem %s0, %s200
      %s202 = smul.u32 4, %s19
      %s203 = smul.u32 4, %s19
      %p204 = scmp.lt.s32.totalorder %s18, 1
      %s205 = scalar_select %p204, %s18, 1
      %p206 = scmp.lt.s32.totalorder %s203, 3
      %s207 = scalar_select %p206, %s203, 3
      %s208 = smul.addr %s205, 16
      %s209 = sadd.s32 %s207, %s208
      %s210 = smul.addr %s209, 8
      %s211 = scalar_lea.vmem %s3, %s210
      %s212 = smul.u32 4, %s19
      %v214 = vld [vmem:[%s201] sm:$0x3]
      %215 = vst [vmem:[#allocation2] sm:$0x3] %v214
      %v216 = vld [vmem:[%s201] sm:$0xc]
      %217 = vst [vmem:[#allocation2] sm:$0xc] %v216
      %v218 = vld [vmem:[%s201] sm:$0x33]
      %220 = vrot.lane.b32.xlu0 %v218, 127
      %v221 = vpop.permute.xlu0 %220
      %v222 = vrot.slane %v221, 4
      %vm223 = vcmask 1039360
      %v224 = vsel %vm223, %v221, %v222
      %226 = vst [vmem:[#allocation2 + $0x10] sm:$0x3] %v224
      %v227 = vld [vmem:[%s201 + $0x8] sm:$0x3]
      %v229 = vrot.slane %v227, 6
      %231 = vst [vmem:[#allocation2 + $0x10] sm:$0xc] %v229
      %v232 = vld [vmem:[%s201 + $0x8] sm:$0xc]
      %v234 = vrot.slane %v232, 6
      %v235 = vrot.slane %v234, 4
      %237 = vst [vmem:[#allocation2 + $0x20] sm:$0x3] %v235
      %v238 = vld [vmem:[%s201 + $0x8] sm:$0x33]
      %v240 = vrot.slane %v238, 6
      %241 = vrot.lane.b32.xlu0 %v240, 127
      %v242 = vpop.permute.xlu0 %241
      %v243 = vrot.slane %v242, 4
      %v244 = vsel %vm223, %v242, %v243
      %246 = vst [vmem:[#allocation2 + $0x20] sm:$0xc] %v244
      %v247 = vld [vmem:[%s201] sm:$0x33]
      %249 = vrot.lane.b32.xlu0 %v247, 119
      %v250 = vpop.permute.xlu0 %249
      %v251 = vrot.slane %v250, 4
      %vm252 = vcmask 973824
      %v253 = vsel %vm252, %v250, %v251
      %255 = vst [vmem:[#allocation2 + $0x30] sm:$0x3] %v253
      %v256 = vld [vmem:[%s201] sm:$0xcc]
      %258 = vrot.lane.b32.xlu0 %v256, 119
      %v259 = vpop.permute.xlu0 %258
      %v260 = vrot.slane %v259, 4
      %v261 = vsel %vm252, %v259, %v260
      %263 = vst [vmem:[#allocation2 + $0x30] sm:$0xc] %v261
      %v264 = vld [vmem:[%s201] sm:$0x33]
      %266 = vrot.lane.b32.xlu0 %v264, 118
      %v267 = vpop.permute.xlu0 %266
      %v268 = vrot.slane %v267, 4
      %vm269 = vcmask 965632
      %v270 = vsel %vm269, %v267, %v268
      %272 = vst [vmem:[#allocation2 + $0x40] sm:$0x3] %v270
      %s273 = scalar_lea.vmem %s201, 16
      %v274 = vld [vmem:[%s273] sm:$0x3]
      %275 = vst [vmem:[#allocation2 + $0x4] sm:$0x3] %v274
      %v276 = vld [vmem:[%s273] sm:$0xc]
      %277 = vst [vmem:[#allocation2 + $0x4] sm:$0xc] %v276
      %v278 = vld [vmem:[%s273] sm:$0x33]
      %280 = vrot.lane.b32.xlu0 %v278, 127
      %v281 = vpop.permute.xlu0 %280
      %v282 = vrot.slane %v281, 4
      %v283 = vsel %vm223, %v281, %v282
      %285 = vst [vmem:[#allocation2 + $0x14] sm:$0x3] %v283
      %v286 = vld [vmem:[%s273 + $0x8] sm:$0x3]
      %v288 = vrot.slane %v286, 6
      %290 = vst [vmem:[#allocation2 + $0x14] sm:$0xc] %v288
      %v291 = vld [vmem:[%s273 + $0x8] sm:$0xc]
      %v293 = vrot.slane %v291, 6
      %v294 = vrot.slane %v293, 4
      %296 = vst [vmem:[#allocation2 + $0x24] sm:$0x3] %v294
      %v297 = vld [vmem:[%s273 + $0x8] sm:$0x33]
      %v299 = vrot.slane %v297, 6
      %300 = vrot.lane.b32.xlu0 %v299, 127
      %v301 = vpop.permute.xlu0 %300
      %v302 = vrot.slane %v301, 4
      %v303 = vsel %vm223, %v301, %v302
      %305 = vst [vmem:[#allocation2 + $0x24] sm:$0xc] %v303
      %v306 = vld [vmem:[%s273] sm:$0x33]
      %308 = vrot.lane.b32.xlu0 %v306, 119
      %v309 = vpop.permute.xlu0 %308
      %v310 = vrot.slane %v309, 4
      %v311 = vsel %vm252, %v309, %v310
      %313 = vst [vmem:[#allocation2 + $0x34] sm:$0x3] %v311
      %v314 = vld [vmem:[%s273] sm:$0xcc]
      %316 = vrot.lane.b32.xlu0 %v314, 119
      %v317 = vpop.permute.xlu0 %316
      %v318 = vrot.slane %v317, 4
      %v319 = vsel %vm252, %v317, %v318
      %321 = vst [vmem:[#allocation2 + $0x34] sm:$0xc] %v319
      %v322 = vld [vmem:[%s273] sm:$0x33]
      %324 = vrot.lane.b32.xlu0 %v322, 118
      %v325 = vpop.permute.xlu0 %324
      %v326 = vrot.slane %v325, 4
      %v327 = vsel %vm269, %v325, %v326
      %329 = vst [vmem:[#allocation2 + $0x44] sm:$0x3] %v327
      %s330 = scalar_lea.vmem %s201, 32
      %v331 = vld [vmem:[%s330] sm:$0x3]
      %332 = vst [vmem:[#allocation2 + $0x8] sm:$0x3] %v331
      %v333 = vld [vmem:[%s330] sm:$0xc]
      %334 = vst [vmem:[#allocation2 + $0x8] sm:$0xc] %v333
      %v335 = vld [vmem:[%s330] sm:$0x33]
      %337 = vrot.lane.b32.xlu0 %v335, 127
      %v338 = vpop.permute.xlu0 %337
      %v339 = vrot.slane %v338, 4
      %v340 = vsel %vm223, %v338, %v339
      %342 = vst [vmem:[#allocation2 + $0x18] sm:$0x3] %v340
      %v343 = vld [vmem:[%s330 + $0x8] sm:$0x3]
      %v345 = vrot.slane %v343, 6
      %347 = vst [vmem:[#allocation2 + $0x18] sm:$0xc] %v345
      %v348 = vld [vmem:[%s330 + $0x8] sm:$0xc]
      %v350 = vrot.slane %v348, 6
      %v351 = vrot.slane %v350, 4
      %353 = vst [vmem:[#allocation2 + $0x28] sm:$0x3] %v351
      %v354 = vld [vmem:[%s330 + $0x8] sm:$0x33]
      %v356 = vrot.slane %v354, 6
      %357 = vrot.lane.b32.xlu0 %v356, 127
      %v358 = vpop.permute.xlu0 %357
      %v359 = vrot.slane %v358, 4
      %v360 = vsel %vm223, %v358, %v359
      %362 = vst [vmem:[#allocation2 + $0x28] sm:$0xc] %v360
      %v363 = vld [vmem:[%s330] sm:$0x33]
      %365 = vrot.lane.b32.xlu0 %v363, 119
      %v366 = vpop.permute.xlu0 %365
      %v367 = vrot.slane %v366, 4
      %v368 = vsel %vm252, %v366, %v367
      %370 = vst [vmem:[#allocation2 + $0x38] sm:$0x3] %v368
      %v371 = vld [vmem:[%s330] sm:$0xcc]
      %373 = vrot.lane.b32.xlu0 %v371, 119
      %v374 = vpop.permute.xlu0 %373
      %v375 = vrot.slane %v374, 4
      %v376 = vsel %vm252, %v374, %v375
      %378 = vst [vmem:[#allocation2 + $0x38] sm:$0xc] %v376
      %v379 = vld [vmem:[%s330] sm:$0x33]
      %381 = vrot.lane.b32.xlu0 %v379, 118
      %v382 = vpop.permute.xlu0 %381
      %v383 = vrot.slane %v382, 4
      %v384 = vsel %vm269, %v382, %v383
      %386 = vst [vmem:[#allocation2 + $0x48] sm:$0x3] %v384
      %s387 = scalar_lea.vmem %s201, 48
      %v388 = vld [vmem:[%s387] sm:$0x3]
      %389 = vst [vmem:[#allocation2 + $0xc] sm:$0x3] %v388
      %v390 = vld [vmem:[%s387] sm:$0xc]
      %391 = vst [vmem:[#allocation2 + $0xc] sm:$0xc] %v390
      %v392 = vld [vmem:[%s387] sm:$0x33]
      %394 = vrot.lane.b32.xlu0 %v392, 127
      %v395 = vpop.permute.xlu0 %394
      %v396 = vrot.slane %v395, 4
      %v397 = vsel %vm223, %v395, %v396
      %399 = vst [vmem:[#allocation2 + $0x1c] sm:$0x3] %v397
      %v400 = vld [vmem:[%s387 + $0x8] sm:$0x3]
      %v402 = vrot.slane %v400, 6
      %404 = vst [vmem:[#allocation2 + $0x1c] sm:$0xc] %v402
      %v405 = vld [vmem:[%s387 + $0x8] sm:$0xc]
      %v407 = vrot.slane %v405, 6
      %v408 = vrot.slane %v407, 4
      %410 = vst [vmem:[#allocation2 + $0x2c] sm:$0x3] %v408
      %v411 = vld [vmem:[%s387 + $0x8] sm:$0x33]
      %v413 = vrot.slane %v411, 6
      %414 = vrot.lane.b32.xlu0 %v413, 127
      %v415 = vpop.permute.xlu0 %414
      %v416 = vrot.slane %v415, 4
      %v417 = vsel %vm223, %v415, %v416
      %419 = vst [vmem:[#allocation2 + $0x2c] sm:$0xc] %v417
      %v420 = vld [vmem:[%s387] sm:$0x33]
      %422 = vrot.lane.b32.xlu0 %v420, 119
      %v423 = vpop.permute.xlu0 %422
      %v424 = vrot.slane %v423, 4
      %v425 = vsel %vm252, %v423, %v424
      %427 = vst [vmem:[#allocation2 + $0x3c] sm:$0x3] %v425
      %v428 = vld [vmem:[%s387] sm:$0xcc]
      %430 = vrot.lane.b32.xlu0 %v428, 119
      %v431 = vpop.permute.xlu0 %430
      %v432 = vrot.slane %v431, 4
      %v433 = vsel %vm252, %v431, %v432
      %435 = vst [vmem:[#allocation2 + $0x3c] sm:$0xc] %v433
      %v436 = vld [vmem:[%s387] sm:$0x33]
      %438 = vrot.lane.b32.xlu0 %v436, 118
      %v439 = vpop.permute.xlu0 %438
      %v440 = vrot.slane %v439, 4
      %v441 = vsel %vm269, %v439, %v440
      %443 = vst [vmem:[#allocation2 + $0x4c] sm:$0x3] %v441
      %v444 = vld [vmem:[%s1] sm:$0xf]
      %v445 = vld [vmem:[%s1 + $0x4] sm:$0xf]
      %v446 = vld [vmem:[%s1 + $0x8] sm:$0xf]
      %v447 = vld [vmem:[%s1 + $0xc] sm:$0xf]
      %v448 = vld [vmem:[#allocation2] sm:$0xff]
      %v449 = vld [vmem:[#allocation2 + $0x8] sm:$0xff]
      %v450 = vld [vmem:[#allocation2 + $0x10] sm:$0xff]
      %v451 = vld [vmem:[#allocation2 + $0x18] sm:$0xff]
      %v452 = vld [vmem:[#allocation2 + $0x20] sm:$0xff]
      %v453 = vld [vmem:[#allocation2 + $0x28] sm:$0xff]
      %v454 = vld [vmem:[#allocation2 + $0x30] sm:$0xff]
      %v455 = vld [vmem:[#allocation2 + $0x38] sm:$0xff]
      %v456 = vld [vmem:[#allocation2 + $0x40] sm:$0x33]
      %v457 = vld [vmem:[#allocation2 + $0x48] sm:$0x33]
      %v458 = vld [vmem:[%s2] sm:$0xff]
      %v459 = vld [vmem:[%s2 + $0x8] sm:$0xff]
      %v460 = vld [vmem:[%s2 + $0x10] sm:$0xff]
      %v461 = vld [vmem:[%s2 + $0x18] sm:$0xff]
      %463 = vset.pattern.permute.xlu0 0
      %464 = vperm.xlu0 %463, %v458
      %v465 = vpop.permute.xlu0 %464
      %468 = vset.pattern.permute.xlu0 0
      %469 = vperm.xlu0 %468, %v459
      %v470 = vpop.permute.xlu0 %469
      %473 = vset.pattern.permute.xlu0 0
      %474 = vperm.xlu0 %473, %v460
      %v475 = vpop.permute.xlu0 %474
      %478 = vset.pattern.permute.xlu0 0
      %479 = vperm.xlu0 %478, %v461
      %v480 = vpop.permute.xlu0 %479
      %v486 = vunpack.c.l.b16 %v444
      %v487 = vunpack.c.l.b16 %v445
      %v488 = vunpack.c.l.b16 %v446
      %v489 = vunpack.c.l.b16 %v447
      %v490 = vpack.c.b16 %v487, %v486
      %v491 = vpack.c.b16 %v489, %v488
      %v502 = vunpack.c.l.b16 %v448
      %v503 = vunpack.c.h.b16 %v448
      %v504 = vunpack.c.l.b16 %v449
      %v505 = vunpack.c.h.b16 %v449
      %v506 = vunpack.c.l.b16 %v450
      %v507 = vunpack.c.h.b16 %v450
      %v508 = vunpack.c.l.b16 %v451
      %v509 = vunpack.c.h.b16 %v451
      %v510 = vunpack.c.l.b16 %v452
      %v511 = vunpack.c.h.b16 %v452
      %v512 = vunpack.c.l.b16 %v453
      %v513 = vunpack.c.h.b16 %v453
      %v514 = vunpack.c.l.b16 %v454
      %v515 = vunpack.c.h.b16 %v454
      %v516 = vunpack.c.l.b16 %v455
      %v517 = vunpack.c.h.b16 %v455
      %v518 = vunpack.c.l.b16 %v456
      %v519 = vunpack.c.h.b16 %v456
      %v520 = vunpack.c.l.b16 %v457
      %v521 = vunpack.c.h.b16 %v457
      %v522 = vpack.c.b16 %v506, %v502
      %v523 = vpack.c.b16 %v507, %v503
      %v524 = vpack.c.b16 %v508, %v504
      %v525 = vpack.c.b16 %v509, %v505
      %v526 = vpack.c.b16 %v514, %v510
      %v527 = vpack.c.b16 %v515, %v511
      %v528 = vpack.c.b16 %v516, %v512
      %v529 = vpack.c.b16 %v517, %v513
      %v530 = vpack.c.b16 %v518, %v518
      %v531 = vpack.c.b16 %v519, %v519
      %v532 = vpack.c.b16 %v520, %v520
      %v533 = vpack.c.b16 %v521, %v521
      %vm542 = vcmask 293888
      %v544 = vsel %vm542, %v490, 0
      %v547 = vsel %vm542, %v491, 0
      %vm549 = vcmask 1041408
      %v551 = vsel %vm549, %v530, 0
      %v554 = vsel %vm549, %v531, 0
      %v557 = vsel %vm549, %v532, 0
      %v560 = vsel %vm549, %v533, 0
      %562 = vmatprep.subr.bf16.mxu0 %v523
      %563 = vmatpush1.bf16.msra.mxu0 %v522
      %564 = vmatprep.subr.bf16.mxu0 %v527
      %565 = vmatpush1.bf16.msra.mxu0 %v526
      %566 = vmatprep.subr.bf16.mxu0 %v554
      %567 = vmatpush1.bf16.msra.mxu0 %v551
      %568 = vmatprep.subr.bf16.mxu0 0
      %569 = vmatpush1.bf16.msra.mxu0 0
      %570 = vmatprep.subr.bf16.mxu0 0
      %571 = vmatpush1.bf16.msra.mxu0 0
      %572 = vmatprep.subr.bf16.mxu0 0
      %573 = vmatpush1.bf16.msra.mxu0 0
      %574 = vmatprep.subr.bf16.mxu0 0
      %575 = vmatpush1.bf16.msra.mxu0 0
      %576 = vmatprep.subr.bf16.mxu0 0
      %577 = vmatpush1.bf16.msra.mxu0 0
      %578 = vmatprep.subr.bf16.mxu0 0
      %579 = vmatpush1.bf16.msra.mxu0 0
      %580 = vmatprep.subr.bf16.mxu0 0
      %581 = vmatpush1.bf16.msra.mxu0 0
      %582 = vmatprep.subr.bf16.mxu0 0
      %583 = vmatpush1.bf16.msra.mxu0 0
      %584 = vmatprep.subr.bf16.mxu0 0
      %585 = vmatpush1.bf16.msra.mxu0 0
      %586 = vmatprep.subr.bf16.mxu0 0
      %587 = vmatpush1.bf16.msra.mxu0 0
      %588 = vmatprep.subr.bf16.mxu0 0
      %589 = vmatpush1.bf16.msra.mxu0 0
      %590 = vmatprep.subr.bf16.mxu0 0
      %591 = vmatpush1.bf16.msra.mxu0 0
      %592 = vmatprep.subr.bf16.mxu0 0
      %593 = vmatpush1.bf16.msra.mxu0 0
      %594 = vmatprep.mubr.bf16.mxu0 0
      %595 = vmatmul.mubr.bf16.gmra.mrb[0].mxu0 %v544
      %v596 = vpop.f32.mrb[0].mxu0
      %v597 = vadd.f32 %v465, %v596
      %v598 = vpop.f32.mrb[0].mxu0
      %v599 = vadd.f32 %v465, %v598
      %v600 = vpop.f32.mrb[0].mxu0
      %v601 = vadd.f32 %v470, %v600
      %v602 = vpop.f32.mrb[0].mxu0
      %v603 = vadd.f32 %v470, %v602
      %604 = vmatprep.mubr.bf16.mxu0 0
      %605 = vmatmul.mubr.bf16.gmra.mrb[0].mxu0 %v547
      %v606 = vpop.f32.mrb[0].mxu0
      %v607 = vadd.f32 %v475, %v606
      %v608 = vpop.f32.mrb[0].mxu0
      %v609 = vadd.f32 %v475, %v608
      %v610 = vpop.f32.mrb[0].mxu0
      %v611 = vadd.f32 %v480, %v610
      %v612 = vpop.f32.mrb[0].mxu0
      %v613 = vadd.f32 %v480, %v612
      %614 = vdwg.mxu0
      %615 = vmatprep.subr.bf16.mxu0 %v525
      %616 = vmatpush1.bf16.msra.mxu0 %v524
      %617 = vmatprep.subr.bf16.mxu0 %v529
      %618 = vmatpush1.bf16.msra.mxu0 %v528
      %619 = vmatprep.subr.bf16.mxu0 %v560
      %620 = vmatpush1.bf16.msra.mxu0 %v557
      %621 = vmatprep.subr.bf16.mxu0 0
      %622 = vmatpush1.bf16.msra.mxu0 0
      %623 = vmatprep.subr.bf16.mxu0 0
      %624 = vmatpush1.bf16.msra.mxu0 0
      %625 = vmatprep.subr.bf16.mxu0 0
      %626 = vmatpush1.bf16.msra.mxu0 0
      %627 = vmatprep.subr.bf16.mxu0 0
      %628 = vmatpush1.bf16.msra.mxu0 0
      %629 = vmatprep.subr.bf16.mxu0 0
      %630 = vmatpush1.bf16.msra.mxu0 0
      %631 = vmatprep.subr.bf16.mxu0 0
      %632 = vmatpush1.bf16.msra.mxu0 0
      %633 = vmatprep.subr.bf16.mxu0 0
      %634 = vmatpush1.bf16.msra.mxu0 0
      %635 = vmatprep.subr.bf16.mxu0 0
      %636 = vmatpush1.bf16.msra.mxu0 0
      %637 = vmatprep.subr.bf16.mxu0 0
      %638 = vmatpush1.bf16.msra.mxu0 0
      %639 = vmatprep.subr.bf16.mxu0 0
      %640 = vmatpush1.bf16.msra.mxu0 0
      %641 = vmatprep.subr.bf16.mxu0 0
      %642 = vmatpush1.bf16.msra.mxu0 0
      %643 = vmatprep.subr.bf16.mxu0 0
      %644 = vmatpush1.bf16.msra.mxu0 0
      %645 = vmatprep.subr.bf16.mxu0 0
      %646 = vmatpush1.bf16.msra.mxu0 0
      %647 = vmatprep.mubr.bf16.mxu0 0
      %648 = vmatmul.mubr.bf16.gmra.mrb[0].mxu0 %v544
      %v649 = vpop.f32.mrb[0].mxu0
      %v650 = vadd.f32 %v465, %v649
      %v651 = vpop.f32.mrb[0].mxu0
      %v652 = vadd.f32 %v465, %v651
      %v653 = vpop.f32.mrb[0].mxu0
      %v654 = vadd.f32 %v470, %v653
      %v655 = vpop.f32.mrb[0].mxu0
      %v656 = vadd.f32 %v470, %v655
      %657 = vmatprep.mubr.bf16.mxu0 0
      %658 = vmatmul.mubr.bf16.gmra.mrb[0].mxu0 %v547
      %v659 = vpop.f32.mrb[0].mxu0
      %v660 = vadd.f32 %v475, %v659
      %v661 = vpop.f32.mrb[0].mxu0
      %v662 = vadd.f32 %v475, %v661
      %v663 = vpop.f32.mrb[0].mxu0
      %v664 = vadd.f32 %v480, %v663
      %v665 = vpop.f32.mrb[0].mxu0
      %v666 = vadd.f32 %v480, %v665
      %667 = vdwg.mxu0
      %v668 = vmul.f32 %v597, 0.5
      %v669 = vmul.f32 %v599, 0.5
      %v670 = vmul.f32 %v650, 0.5
      %v671 = vmul.f32 %v652, 0.5
      %v672 = vmul.f32 %v601, 0.5
      %v673 = vmul.f32 %v603, 0.5
      %v674 = vmul.f32 %v654, 0.5
      %v675 = vmul.f32 %v656, 0.5
      %v676 = vmul.f32 %v607, 0.5
      %v677 = vmul.f32 %v609, 0.5
      %v678 = vmul.f32 %v660, 0.5
      %v679 = vmul.f32 %v662, 0.5
      %v680 = vmul.f32 %v611, 0.5
      %v681 = vmul.f32 %v613, 0.5
      %v682 = vmul.f32 %v664, 0.5
      %v683 = vmul.f32 %v666, 0.5
      %v684 = vmul.f32 %v597, 0.044715
      %v685 = vmul.f32 %v599, 0.044715
      %v686 = vmul.f32 %v650, 0.044715
      %v687 = vmul.f32 %v652, 0.044715
      %v688 = vmul.f32 %v601, 0.044715
      %v689 = vmul.f32 %v603, 0.044715
      %v690 = vmul.f32 %v654, 0.044715
      %v691 = vmul.f32 %v656, 0.044715
      %v692 = vmul.f32 %v607, 0.044715
      %v693 = vmul.f32 %v609, 0.044715
      %v694 = vmul.f32 %v660, 0.044715
      %v695 = vmul.f32 %v662, 0.044715
      %v696 = vmul.f32 %v611, 0.044715
      %v697 = vmul.f32 %v613, 0.044715
      %v698 = vmul.f32 %v664, 0.044715
      %v699 = vmul.f32 %v666, 0.044715
      %v700 = vmul.f32 %v684, %v597
      %v701 = vmul.f32 %v685, %v599
      %v702 = vmul.f32 %v686, %v650
      %v703 = vmul.f32 %v687, %v652
      %v704 = vmul.f32 %v688, %v601
      %v705 = vmul.f32 %v689, %v603
      %v706 = vmul.f32 %v690, %v654
      %v707 = vmul.f32 %v691, %v656
      %v708 = vmul.f32 %v692, %v607
      %v709 = vmul.f32 %v693, %v609
      %v710 = vmul.f32 %v694, %v660
      %v711 = vmul.f32 %v695, %v662
      %v712 = vmul.f32 %v696, %v611
      %v713 = vmul.f32 %v697, %v613
      %v714 = vmul.f32 %v698, %v664
      %v715 = vmul.f32 %v699, %v666
      %v716 = vmul.f32 %v700, %v597
      %v717 = vmul.f32 %v701, %v599
      %v718 = vmul.f32 %v702, %v650
      %v719 = vmul.f32 %v703, %v652
      %v720 = vmul.f32 %v704, %v601
      %v721 = vmul.f32 %v705, %v603
      %v722 = vmul.f32 %v706, %v654
      %v723 = vmul.f32 %v707, %v656
      %v724 = vmul.f32 %v708, %v607
      %v725 = vmul.f32 %v709, %v609
      %v726 = vmul.f32 %v710, %v660
      %v727 = vmul.f32 %v711, %v662
      %v728 = vmul.f32 %v712, %v611
      %v729 = vmul.f32 %v713, %v613
      %v730 = vmul.f32 %v714, %v664
      %v731 = vmul.f32 %v715, %v666
      %v732 = vadd.f32 %v597, %v716
      %v733 = vadd.f32 %v599, %v717
      %v734 = vadd.f32 %v650, %v718
      %v735 = vadd.f32 %v652, %v719
      %v736 = vadd.f32 %v601, %v720
      %v737 = vadd.f32 %v603, %v721
      %v738 = vadd.f32 %v654, %v722
      %v739 = vadd.f32 %v656, %v723
      %v740 = vadd.f32 %v607, %v724
      %v741 = vadd.f32 %v609, %v725
      %v742 = vadd.f32 %v660, %v726
      %v743 = vadd.f32 %v662, %v727
      %v744 = vadd.f32 %v611, %v728
      %v745 = vadd.f32 %v613, %v729
      %v746 = vadd.f32 %v664, %v730
      %v747 = vadd.f32 %v666, %v731
      %v748 = vmul.f32 %v732, 0.7978846
      %v749 = vmul.f32 %v733, 0.7978846
      %v750 = vmul.f32 %v734, 0.7978846
      %v751 = vmul.f32 %v735, 0.7978846
      %v752 = vmul.f32 %v736, 0.7978846
      %v753 = vmul.f32 %v737, 0.7978846
      %v754 = vmul.f32 %v738, 0.7978846
      %v755 = vmul.f32 %v739, 0.7978846
      %v756 = vmul.f32 %v740, 0.7978846
      %v757 = vmul.f32 %v741, 0.7978846
      %v758 = vmul.f32 %v742, 0.7978846
      %v759 = vmul.f32 %v743, 0.7978846
      %v760 = vmul.f32 %v744, 0.7978846
      %v761 = vmul.f32 %v745, 0.7978846
      %v762 = vmul.f32 %v746, 0.7978846
      %v763 = vmul.f32 %v747, 0.7978846
      %v764 = vtanh.pop %v748
      %v765 = vtanh.pop %v749
      %v766 = vtanh.pop %v750
      %v767 = vtanh.pop %v751
      %v768 = vtanh.pop %v752
      %v769 = vtanh.pop %v753
      %v770 = vtanh.pop %v754
      %v771 = vtanh.pop %v755
      %v772 = vtanh.pop %v756
      %v773 = vtanh.pop %v757
      %v774 = vtanh.pop %v758
      %v775 = vtanh.pop %v759
      %v776 = vtanh.pop %v760
      %v777 = vtanh.pop %v761
      %v778 = vtanh.pop %v762
      %v779 = vtanh.pop %v763
      %v780 = vadd.f32 %v764, 1.0
      %v781 = vadd.f32 %v765, 1.0
      %v782 = vadd.f32 %v766, 1.0
      %v783 = vadd.f32 %v767, 1.0
      %v784 = vadd.f32 %v768, 1.0
      %v785 = vadd.f32 %v769, 1.0
      %v786 = vadd.f32 %v770, 1.0
      %v787 = vadd.f32 %v771, 1.0
      %v788 = vadd.f32 %v772, 1.0
      %v789 = vadd.f32 %v773, 1.0
      %v790 = vadd.f32 %v774, 1.0
      %v791 = vadd.f32 %v775, 1.0
      %v792 = vadd.f32 %v776, 1.0
      %v793 = vadd.f32 %v777, 1.0
      %v794 = vadd.f32 %v778, 1.0
      %v795 = vadd.f32 %v779, 1.0
      %v796 = vmul.f32 %v668, %v780
      %v797 = vmul.f32 %v669, %v781
      %v798 = vmul.f32 %v670, %v782
      %v799 = vmul.f32 %v671, %v783
      %v800 = vmul.f32 %v672, %v784
      %v801 = vmul.f32 %v673, %v785
      %v802 = vmul.f32 %v674, %v786
      %v803 = vmul.f32 %v675, %v787
      %v804 = vmul.f32 %v676, %v788
      %v805 = vmul.f32 %v677, %v789
      %v806 = vmul.f32 %v678, %v790
      %v807 = vmul.f32 %v679, %v791
      %v808 = vmul.f32 %v680, %v792
      %v809 = vmul.f32 %v681, %v793
      %v810 = vmul.f32 %v682, %v794
      %v811 = vmul.f32 %v683, %v795
      %812 = vst [vmem:[%s211] sm:$0xff] %v796
      %813 = vst [vmem:[%s211 + $0x8] sm:$0xff] %v797
      %814 = vst [vmem:[%s211 + $0x10] sm:$0xff] %v798
      %815 = vst [vmem:[%s211 + $0x18] sm:$0xff] %v799
      %816 = vst [vmem:[%s211 + $0x20] sm:$0xff] %v800
      %817 = vst [vmem:[%s211 + $0x28] sm:$0xff] %v801
      %818 = vst [vmem:[%s211 + $0x30] sm:$0xff] %v802
      %819 = vst [vmem:[%s211 + $0x38] sm:$0xff] %v803
      %820 = vst [vmem:[%s211 + $0x40] sm:$0xff] %v804
      %821 = vst [vmem:[%s211 + $0x48] sm:$0xff] %v805
      %822 = vst [vmem:[%s211 + $0x50] sm:$0xff] %v806
      %823 = vst [vmem:[%s211 + $0x58] sm:$0xff] %v807
      %824 = vst [vmem:[%s211 + $0x60] sm:$0xff] %v808
      %825 = vst [vmem:[%s211 + $0x68] sm:$0xff] %v809
      %826 = vst [vmem:[%s211 + $0x70] sm:$0xff] %v810
      %827 = vst [vmem:[%s211 + $0x78] sm:$0xff] %v811
      %s828 = smul.u32 4, %s19
      %p829 = scmp.lt.s32.totalorder %s18, 1
      %s830 = scalar_select %p829, %s18, 1
      %p831 = scmp.lt.s32.totalorder %s828, 3
      %s832 = scalar_select %p831, %s828, 3
      %s833 = smul.addr %s830, 16
      %s834 = sadd.s32 %s832, %s833
      %s835 = smul.addr %s834, 8
      %s836 = scalar_lea.vmem %s3, %s835
      // Predicated region
      $region33: #{hdnerv3_encoder_forward.1} parent=31 // pred_check
        %p837 = pneg %p116
      $region34: #{hdnerv3_encoder_forward.1} parent=31 // pred_check_branch
        %839 = sbr.rel (%p837) target = $region36
      $region35: #{hdnerv3_encoder_forward.1} parent=31 // pred_region
        %s840 = smul.u32 4, %s19
      $region36: #{hdnerv3_encoder_forward.1} parent=31 // pred_fallthru
        _
    $region32: #{hdnerv3_encoder_forward.1} parent=5 // pred_fallthru
      _
    %p841 = scmp.le.s32.totalorder 2, %s9
    // Predicated region
    $region37: #{hdnerv3_encoder_forward.1} parent=5 // pred_check
      %p842 = pneg %p841
    $region38: #{hdnerv3_encoder_forward.1} parent=5 // pred_check_branch
      %844 = sbr.rel (%p842) target = $region40
    $region39: #{hdnerv3_encoder_forward.1} parent=5 // pred_region
      %s845 = ssub.s32 %s9, 2
      // Predicated region
      $region41: #{hdnerv3_encoder_forward.1} parent=39 // pred_check
        %p846 = pneg %p122
      $region42: #{hdnerv3_encoder_forward.1} parent=39 // pred_check_branch
        %848 = sbr.rel (%p846) target = $region44
      $region43: #{hdnerv3_encoder_forward.1} parent=39 // pred_region
        %s849 = smul.u32 4, %s21
        %p850 = scmp.lt.s32.totalorder %s20, 1
        %s851 = scalar_select %p850, %s20, 1
        %p852 = scmp.lt.s32.totalorder %s849, 3
        %s853 = scalar_select %p852, %s849, 3
        %s854 = smul.addr %s851, 16
        %s855 = sadd.s32 %s853, %s854
        %s856 = smul.addr %s855, 8
        %s857 = scalar_lea.vmem %s3, %s856
      $region44: #{hdnerv3_encoder_forward.1} parent=39 // pred_fallthru
        _
    $region40: #{hdnerv3_encoder_forward.1} parent=5 // pred_fallthru
      _
  $region6: #{hdnerv3_encoder_forward.1} parent=0 // loop_footer
    %s13 = sadd.s32 1, %s9
  $region7: #{hdnerv3_encoder_forward.1} parent=0 // loop_footer_branch
    %8 = sbr.rel target = $region3
  $region8: #{hdnerv3_encoder_forward.1} parent=0 // loop_exit
    _

</llo_original>
